<compile_context>
chip_gen: v7x
topology: tpu7x:2x2x1
jax: 0.10.0
libtpu: 0.0.40
codegen_flags: <defaults>
</compile_context>

<pallas_src>
import functools

import jax
import jax.numpy as jnp
from jax.experimental import pallas as pl
from jax.experimental.pallas import tpu as pltpu

REMINE_LAMBDA = 0.1
LADE_WEIGHT = 0.1
_NEG_BIG = -1e30
_NUM_CORE_SPLITS = 2   # leading "parallel" axis: 2x on v7x, serialized on v5e/v6e


def _unified_loss_kernel(
    y_ref, tgt_ref, lp_ref, nlb_ref,                          # inputs
    ce_ref, cls_sum_ref, cls_cnt_ref, cmax_ref, cexp_ref,     # per-core partial outputs
    *, n_valid, has_partial,
):
    c = pl.program_id(0)                 # core-split index ("parallel")
    i = pl.program_id(1)                 # row-tile index within split ("arbitrary")
    tiles_per_core = pl.num_programs(1)

    @pl.when(i == 0)
    def _init():
        ce_ref[...] = jnp.zeros_like(ce_ref)
        cls_sum_ref[...] = jnp.zeros_like(cls_sum_ref)
        cls_cnt_ref[...] = jnp.zeros_like(cls_cnt_ref)
        cmax_ref[...] = jnp.full_like(cmax_ref, _NEG_BIG)   # NOT -inf (see header)
        cexp_ref[...] = jnp.zeros_like(cexp_ref)

    y = y_ref[...].astype(jnp.float32)   # native-dtype DMA, per-tile f32 cast
    tgt = tgt_ref[...]                   # (T, 1) int32
    lp = lp_ref[...]                     # (1, C) log(prior + 1e-9)
    nlb = nlb_ref[...]                   # (1, C) log(1/C + 1e-9) - log_prior
    T, C = y.shape

    def accumulate(row_valid):
        cls_idx = jax.lax.broadcasted_iota(jnp.int32, (1, C), 1)
        mask = tgt == cls_idx                               # (T, C) bool
        if row_valid is not None:
            mask = jnp.logical_and(mask, row_valid)
        yo = jnp.where(mask, y, 0.0)                        # y*onehot, no cast+mul

        # -------- PriorCE partial: sum_n [LSE(y_n + lp) - y_n[t_n]] --------
        # (the missing -lp[t_n] is recovered in the wrapper via cls_cnt)
        logits = y + lp
        row_max = jnp.max(logits, axis=1, keepdims=True)
        lse = row_max + jnp.log(
            jnp.sum(jnp.exp(logits - row_max), axis=1, keepdims=True))
        ce_term = lse - jnp.sum(yo, axis=1, keepdims=True)
        if row_valid is not None:
            ce_term = jnp.where(row_valid, ce_term, 0.0)
        ce_ref[...] += jnp.sum(ce_term)

        # -------- LADE running statistics --------
        cls_sum_ref[...] += jnp.sum(yo, axis=0, keepdims=True)
        cls_cnt_ref[...] += jnp.sum(jnp.where(mask, 1.0, 0.0), axis=0,
                                    keepdims=True)

        spread = y + nlb
        if row_valid is not None:
            spread = jnp.where(row_valid, spread, _NEG_BIG)
        m_old = cmax_ref[...]
        m_new = jnp.maximum(m_old, jnp.max(spread, axis=0, keepdims=True))
        cexp_ref[...] = (cexp_ref[...] * jnp.exp(m_old - m_new)
                         + jnp.sum(jnp.exp(spread - m_new), axis=0, keepdims=True))
        cmax_ref[...] = m_new

    if has_partial:
        global_tile = c * tiles_per_core + i
        is_full = (global_tile + 1) * T <= n_valid

        @pl.when(is_full)
        def _full_tile():                # hot path: no per-element row masking
            accumulate(None)

        @pl.when(jnp.logical_not(is_full))
        def _ragged_tile():              # ragged / fully-out-of-range tile
            row_idx = (global_tile * T
                       + jax.lax.broadcasted_iota(jnp.int32, (T, 1), 0))
            accumulate(row_idx < n_valid)
    else:
        accumulate(None)


def _round_up(x, m):
    return ((x + m - 1) // m) * m


def _vmem_capacity_bytes():
    try:
        info = pltpu.get_tpu_info()
        cap = getattr(info, "vmem_capacity_bytes", None)
        if cap:
            return int(cap)
    except Exception:
        pass
    return 64 * 1024 * 1024   # conservative (v7x per-TensorCore)


@functools.partial(jax.jit, static_argnames=("tile_n",))
def unified_loss_pallas(y_pred, target, log_prior, cls_weight, tile_n=None):
    N, C = y_pred.shape
    log_prior = log_prior.reshape(C).astype(jnp.float32)
    cls_weight = cls_weight.reshape(C).astype(jnp.float32)

    itemsize = jnp.dtype(y_pred.dtype).itemsize
    sublane = {4: 8, 2: 16, 1: 32}.get(itemsize, 8)

    # --- generation-aware VMEM budget ---------------------------------------
    cap = _vmem_capacity_bytes()
    if cap >= 96 * 1024 * 1024:          # v5e / v6e: 128 MiB physical VMEM
        tile_budget, vmem_limit = 40 * 1024 * 1024, 96 * 1024 * 1024
    else:                                # v7x: 64 MiB per TensorCore
        tile_budget, vmem_limit = 16 * 1024 * 1024, 48 * 1024 * 1024

    if tile_n is None:
        c_lanes = _round_up(C, 128)      # VMEM lane padding of the tile
        # double-buffered native-dtype y tile + ~6 f32-sized temporaries/elem
        per_row = c_lanes * (2 * itemsize + 6 * 4)
        tile_n = max(sublane, min(2048, tile_budget // per_row))
    tile_n = max(sublane, (int(tile_n) // sublane) * sublane)
    tile_n = min(tile_n, _round_up(N, sublane))

    n_tiles = pl.cdiv(N, tile_n)
    tiles_per_core = pl.cdiv(n_tiles, _NUM_CORE_SPLITS)
    has_partial = (_NUM_CORE_SPLITS * tiles_per_core * tile_n) != N

    tgt = target.astype(jnp.int32).reshape(N, 1)
    lp_row = log_prior.reshape(1, C)
    nlb_row = (jnp.log(jnp.float32(1.0 / C) + 1e-9) - log_prior).reshape(1, C)

    def row_map(c, i):
        # clamp so a fully-out-of-range tile re-reads a valid tile (its rows
        # are masked in-kernel via the global row index anyway)
        return (jnp.minimum(c * tiles_per_core + i, n_tiles - 1), 0)

    kernel = functools.partial(_unified_loss_kernel, n_valid=N,
                               has_partial=has_partial)

    stats_shape = jax.ShapeDtypeStruct((_NUM_CORE_SPLITS, 1, C), jnp.float32)
    stats_spec = pl.BlockSpec((None, 1, C), lambda c, i: (c, 0, 0))

    ce_p, cls_sum_p, cls_cnt_p, cmax_p, cexp_p = pl.pallas_call(
        kernel,
        out_shape=(jax.ShapeDtypeStruct((_NUM_CORE_SPLITS, 1, 1), jnp.float32),
                   stats_shape, stats_shape, stats_shape, stats_shape),
        grid_spec=pltpu.PrefetchScalarGridSpec(
            num_scalar_prefetch=0,
            grid=(_NUM_CORE_SPLITS, tiles_per_core),
            in_specs=[
                pl.BlockSpec((tile_n, C), row_map),           # y (unpadded, native)
                pl.BlockSpec((tile_n, 1), row_map),           # target
                pl.BlockSpec((1, C), lambda c, i: (0, 0)),    # log_prior row
                pl.BlockSpec((1, C), lambda c, i: (0, 0)),    # log(1/C+eps)-log_prior
            ],
            out_specs=(pl.BlockSpec((None, 1, 1), lambda c, i: (c, 0, 0)),
                       stats_spec, stats_spec, stats_spec, stats_spec),
        ),
        compiler_params=pltpu.CompilerParams(
            dimension_semantics=("parallel", "arbitrary"),
            vmem_limit_bytes=vmem_limit,
        ),
    )(y_pred, tgt, lp_row, nlb_row)

    # --- merge per-core partials + finalize (tiny C-sized math) -------------
    n_f = jnp.float32(N)
    ce_sum = jnp.sum(ce_p)
    cls_sum = jnp.sum(cls_sum_p[:, 0, :], axis=0)
    cls_cnt = jnp.sum(cls_cnt_p[:, 0, :], axis=0)
    cmax = cmax_p[:, 0, :]
    cexp = cexp_p[:, 0, :]

    loss_priorce = (ce_sum - jnp.sum(cls_cnt * log_prior)) / n_f

    m = jnp.max(cmax, axis=0)
    s = jnp.sum(cexp * jnp.exp(cmax - m[None, :]), axis=0)
    second = m + jnp.log(s) - jnp.log(n_f)
    first = cls_sum / (cls_cnt + 1e-8)
    estim = first - second - second * second * REMINE_LAMBDA
    loss_lade = -jnp.sum(estim * cls_weight)
    return loss_priorce + LADE_WEIGHT * loss_lade


def unified_loss_ref(y_pred, target, log_prior, cls_weight):
    """Pure-JAX reference mirroring the PyTorch module."""
    y = y_pred.astype(jnp.float32)
    N, C = y.shape
    onehot = (target[:, None] == jnp.arange(C)[None, :]).astype(jnp.float32)

    logits = y + log_prior[None, :]
    lse = jax.scipy.special.logsumexp(logits, axis=1)
    tgt_logit = jnp.sum(logits * onehot, axis=1)
    loss_priorce = jnp.mean(lse - tgt_logit)

    num_per_cls = jnp.sum(onehot, axis=0)
    first = jnp.sum(y * onehot, axis=0) / (num_per_cls + 1e-8)
    log_bal = jnp.log(1.0 / C + 1e-9)
    spread = y - log_prior[None, :] + log_bal
    second = jax.scipy.special.logsumexp(spread, axis=0) - jnp.log(jnp.float32(N))
    estim = first - second - second**2 * REMINE_LAMBDA
    loss_lade = -jnp.sum(estim * cls_weight)
    return loss_priorce + LADE_WEIGHT * loss_lade


if __name__ == "__main__":
    key = jax.random.PRNGKey(0)

    # ---- priors for C = 4 ----
    C = 4
    cls_num_list = jnp.asarray([40.0, 30.0, 20.0, 10.0], jnp.float32)
    prior = cls_num_list / jnp.sum(cls_num_list)
    log_prior = jnp.log(prior + 1e-9)
    cls_weight = prior                    # module: img_num / sum(img_num)

    k1, k2, k3, k4, k5, k6 = jax.random.split(key, 6)

    # Test 1: f32, single in-bounds tile (core 1 gets a fully-masked tile).
    N1 = 8
    y1 = jax.random.normal(k1, (N1, C), jnp.float32)
    t1 = jax.random.randint(k2, (N1,), 0, C, jnp.int32)
    out1 = unified_loss_pallas(y1, t1, log_prior, cls_weight)
    jax.block_until_ready(out1)
    ref1 = unified_loss_ref(y1, t1, log_prior, cls_weight)
    assert jnp.allclose(out1, ref1, rtol=1e-5, atol=1e-5), (out1, ref1)

    # Test 2: bf16 (native-dtype DMA), ragged last tile split across the two
    # core partitions -> exercises masked path + cross-core LSE merge.
    N2 = 29
    y2 = jax.random.normal(k3, (N2, C), jnp.float32).astype(jnp.bfloat16)
    t2 = jax.random.randint(k4, (N2,), 0, C, jnp.int32)
    out2 = unified_loss_pallas(y2, t2, log_prior, cls_weight, tile_n=16)
    jax.block_until_ready(out2)
    ref2 = unified_loss_ref(y2.astype(jnp.float32), t2, log_prior, cls_weight)
    assert jnp.allclose(out2, ref2, rtol=1e-3, atol=1e-3), (out2, ref2)

    # Test 3: evenly divisible N -> pure unmasked hot path, C not lane-aligned.
    C3 = 6
    cls_num3 = jnp.arange(1, C3 + 1, dtype=jnp.float32)
    prior3 = cls_num3 / jnp.sum(cls_num3)
    log_prior3 = jnp.log(prior3 + 1e-9)
    cls_weight3 = prior3
    N3 = 32
    y3 = jax.random.normal(k5, (N3, C3), jnp.float32)
    t3 = jax.random.randint(k6, (N3,), 0, C3, jnp.int32)
    out3 = unified_loss_pallas(y3, t3, log_prior3, cls_weight3, tile_n=8)
    jax.block_until_ready(out3)
    ref3 = unified_loss_ref(y3, t3, log_prior3, cls_weight3)
    assert jnp.allclose(out3, ref3, rtol=1e-5, atol=1e-5), (out3, ref3)

    print("KERNEL_OK")
</pallas_src>

<mosaic_0001>
module attributes {stable_mosaic.version = 11 : i64} {
  func.func @_unified_loss_kernel(%arg0: i32, %arg1: i32, %arg2: memref<8x4xf32, #tpu.memory_space<vmem>>, %arg3: memref<8x1xi32, #tpu.memory_space<vmem>>, %arg4: memref<1x4xf32, #tpu.memory_space<vmem>>, %arg5: memref<1x4xf32, #tpu.memory_space<vmem>>, %arg6: memref<1x1x1xf32, #tpu.memory_space<vmem>>, %arg7: memref<1x1x4xf32, #tpu.memory_space<vmem>>, %arg8: memref<1x1x4xf32, #tpu.memory_space<vmem>>, %arg9: memref<1x1x4xf32, #tpu.memory_space<vmem>>, %arg10: memref<1x1x4xf32, #tpu.memory_space<vmem>>) attributes {dimension_semantics = [#tpu.dimension_semantics<parallel>, #tpu.dimension_semantics<arbitrary>], iteration_bounds = array<i64: 2, 1>, scalar_prefetch = 0 : i64, scratch_operands = 0 : i64, tpu.core_type = #tpu.core_type<tc>, window_params = [{transform_indices = @transform_0, window_bounds = array<i64: 8, 4>}, {transform_indices = @transform_1, window_bounds = array<i64: 8, 1>}, {pipeline_mode = #tpu.pipeline_mode<synchronous>, transform_indices = @transform_2, window_bounds = array<i64: 1, 4>}, {pipeline_mode = #tpu.pipeline_mode<synchronous>, transform_indices = @transform_3, window_bounds = array<i64: 1, 4>}, {transform_indices = @transform_4, window_bounds = array<i64: 1, 1, 1>}, {transform_indices = @transform_5, window_bounds = array<i64: 1, 1, 4>}, {transform_indices = @transform_6, window_bounds = array<i64: 1, 1, 4>}, {transform_indices = @transform_7, window_bounds = array<i64: 1, 1, 4>}, {transform_indices = @transform_8, window_bounds = array<i64: 1, 1, 4>}]} {
    %c0_i32 = arith.constant 0 : i32
    %0 = arith.cmpi eq, %arg1, %c0_i32 : i32
    %1 = arith.extui %0 : i1 to i32
    %c0_i32_0 = arith.constant 0 : i32
    %2 = arith.cmpi ne, %1, %c0_i32_0 : i32
    scf.if %2 {
      %cst = arith.constant 0.000000e+00 : f32
      %17 = vector.broadcast %cst : f32 to vector<1x1xf32>
      %c0_12 = arith.constant 0 : index
      %c0_13 = arith.constant 0 : index
      %c0_14 = arith.constant 0 : index
      %18 = vector.load %arg6[%c0_12, %c0_13, %c0_14] : memref<1x1x1xf32, #tpu.memory_space<vmem>>, vector<1x1x1xf32>
      %19 = vector.shape_cast %18 : vector<1x1x1xf32> to vector<1x1xf32>
      %20 = vector.shape_cast %17 : vector<1x1xf32> to vector<1x1x1xf32>
      tpu.vector_store %arg6[%c0_12, %c0_13, %c0_14], %20 {strides = array<i32>} : memref<1x1x1xf32, #tpu.memory_space<vmem>>, vector<1x1x1xf32>,
      %cst_15 = arith.constant 0.000000e+00 : f32
      %21 = vector.broadcast %cst_15 : f32 to vector<1x4xf32>
      %c0_16 = arith.constant 0 : index
      %c0_17 = arith.constant 0 : index
      %c0_18 = arith.constant 0 : index
      %22 = vector.load %arg7[%c0_16, %c0_17, %c0_18] : memref<1x1x4xf32, #tpu.memory_space<vmem>>, vector<1x1x4xf32>
      %23 = vector.shape_cast %22 : vector<1x1x4xf32> to vector<1x4xf32>
      %24 = vector.shape_cast %21 : vector<1x4xf32> to vector<1x1x4xf32>
      tpu.vector_store %arg7[%c0_16, %c0_17, %c0_18], %24 {strides = array<i32>} : memref<1x1x4xf32, #tpu.memory_space<vmem>>, vector<1x1x4xf32>,
      %cst_19 = arith.constant 0.000000e+00 : f32
      %25 = vector.broadcast %cst_19 : f32 to vector<1x4xf32>
      %c0_20 = arith.constant 0 : index
      %c0_21 = arith.constant 0 : index
      %c0_22 = arith.constant 0 : index
      %26 = vector.load %arg8[%c0_20, %c0_21, %c0_22] : memref<1x1x4xf32, #tpu.memory_space<vmem>>, vector<1x1x4xf32>
      %27 = vector.shape_cast %26 : vector<1x1x4xf32> to vector<1x4xf32>
      %28 = vector.shape_cast %25 : vector<1x4xf32> to vector<1x1x4xf32>
      tpu.vector_store %arg8[%c0_20, %c0_21, %c0_22], %28 {strides = array<i32>} : memref<1x1x4xf32, #tpu.memory_space<vmem>>, vector<1x1x4xf32>,
      %cst_23 = arith.constant -1.000000e+30 : f32
      %29 = vector.broadcast %cst_23 : f32 to vector<1x4xf32>
      %c0_24 = arith.constant 0 : index
      %c0_25 = arith.constant 0 : index
      %c0_26 = arith.constant 0 : index
      %30 = vector.load %arg9[%c0_24, %c0_25, %c0_26] : memref<1x1x4xf32, #tpu.memory_space<vmem>>, vector<1x1x4xf32>
      %31 = vector.shape_cast %30 : vector<1x1x4xf32> to vector<1x4xf32>
      %32 = vector.shape_cast %29 : vector<1x4xf32> to vector<1x1x4xf32>
      tpu.vector_store %arg9[%c0_24, %c0_25, %c0_26], %32 {strides = array<i32>} : memref<1x1x4xf32, #tpu.memory_space<vmem>>, vector<1x1x4xf32>,
      %cst_27 = arith.constant 0.000000e+00 : f32
      %33 = vector.broadcast %cst_27 : f32 to vector<1x4xf32>
      %c0_28 = arith.constant 0 : index
      %c0_29 = arith.constant 0 : index
      %c0_30 = arith.constant 0 : index
      %34 = vector.load %arg10[%c0_28, %c0_29, %c0_30] : memref<1x1x4xf32, #tpu.memory_space<vmem>>, vector<1x1x4xf32>
      %35 = vector.shape_cast %34 : vector<1x1x4xf32> to vector<1x4xf32>
      %36 = vector.shape_cast %33 : vector<1x4xf32> to vector<1x1x4xf32>
      tpu.vector_store %arg10[%c0_28, %c0_29, %c0_30], %36 {strides = array<i32>} : memref<1x1x4xf32, #tpu.memory_space<vmem>>, vector<1x1x4xf32>,
    } else {
    }
    %c0 = arith.constant 0 : index
    %c0_1 = arith.constant 0 : index
    %3 = vector.load %arg2[%c0, %c0_1] : memref<8x4xf32, #tpu.memory_space<vmem>>, vector<8x4xf32>
    %c0_2 = arith.constant 0 : index
    %c0_3 = arith.constant 0 : index
    %4 = vector.load %arg3[%c0_2, %c0_3] : memref<8x1xi32, #tpu.memory_space<vmem>>, vector<8x1xi32>
    %c0_4 = arith.constant 0 : index
    %c0_5 = arith.constant 0 : index
    %5 = vector.load %arg4[%c0_4, %c0_5] : memref<1x4xf32, #tpu.memory_space<vmem>>, vector<1x4xf32>
    %c0_6 = arith.constant 0 : index
    %c0_7 = arith.constant 0 : index
    %6 = vector.load %arg5[%c0_6, %c0_7] : memref<1x4xf32, #tpu.memory_space<vmem>>, vector<1x4xf32>
    %c1_i32 = arith.constant 1 : i32
    %7 = arith.muli %arg0, %c1_i32 : i32
    %8 = arith.addi %7, %arg1 : i32
    %c1_i32_8 = arith.constant 1 : i32
    %9 = arith.addi %8, %c1_i32_8 : i32
    %c8_i32 = arith.constant 8 : i32
    %10 = arith.muli %9, %c8_i32 : i32
    %c8_i32_9 = arith.constant 8 : i32
    %11 = arith.cmpi sle, %10, %c8_i32_9 : i32
    %12 = arith.extui %11 : i1 to i32
    %c0_i32_10 = arith.constant 0 : i32
    %13 = arith.cmpi ne, %12, %c0_i32_10 : i32
    scf.if %13 {
      %17 = tpu.iota {dimensions = array<i32: 1>} : vector<1x4xi32>
      %18 = vector.broadcast %4 : vector<8x1xi32> to vector<8x4xi32>
      %19 = vector.broadcast %17 : vector<1x4xi32> to vector<8x4xi32>
      %20 = arith.cmpi eq, %18, %19 : vector<8x4xi32>
      %cst = arith.constant 0.000000e+00 : f32
      %21 = vector.broadcast %cst : f32 to vector<8x4xf32>
      %22 = arith.select %20, %3, %21 : vector<8x4xi1>, vector<8x4xf32>
      %23 = vector.broadcast %5 : vector<1x4xf32> to vector<8x4xf32>
      %24 = arith.addf %3, %23 : vector<8x4xf32>
      %cst_12 = arith.constant dense<0xFF800000> : vector<8xf32>
      %25 = vector.multi_reduction <maximumf>, %24, %cst_12 [1] : vector<8x4xf32> to vector<8xf32>
      %26 = vector.shape_cast %25 : vector<8xf32> to vector<8x1xf32>
      %27 = vector.broadcast %26 : vector<8x1xf32> to vector<8x4xf32>
      %28 = arith.subf %24, %27 : vector<8x4xf32>
      %29 = math.exp %28 : vector<8x4xf32>
      %cst_13 = arith.constant dense<0.000000e+00> : vector<8xf32>
      %30 = vector.multi_reduction <add>, %29, %cst_13 [1] : vector<8x4xf32> to vector<8xf32>
      %31 = vector.shape_cast %30 : vector<8xf32> to vector<8x1xf32>
      %32 = math.log %31 : vector<8x1xf32>
      %33 = arith.addf %26, %32 : vector<8x1xf32>
      %cst_14 = arith.constant dense<0.000000e+00> : vector<8xf32>
      %34 = vector.multi_reduction <add>, %22, %cst_14 [1] : vector<8x4xf32> to vector<8xf32>
      %35 = vector.shape_cast %34 : vector<8xf32> to vector<8x1xf32>
      %36 = arith.subf %33, %35 : vector<8x1xf32>
      %c0_15 = arith.constant 0 : index
      %c0_16 = arith.constant 0 : index
      %c0_17 = arith.constant 0 : index
      %37 = vector.load %arg6[%c0_15, %c0_16, %c0_17] : memref<1x1x1xf32, #tpu.memory_space<vmem>>, vector<1x1x1xf32>
      %38 = vector.shape_cast %37 : vector<1x1x1xf32> to vector<1x1xf32>
      %39 = vector.shape_cast %36 : vector<8x1xf32> to vector<1x8x1xf32>
      %cst_18 = arith.constant dense<0.000000e+00> : vector<1xf32>
      %40 = vector.multi_reduction <add>, %39, %cst_18 [1, 2] : vector<1x8x1xf32> to vector<1xf32>
      %41 = vector.shape_cast %40 : vector<1xf32> to vector<1x1x1xf32>
      %42 = vector.extract %41[0, 0, 0] : f32 from vector<1x1x1xf32>
      %43 = vector.broadcast %42 : f32 to vector<1x1xf32>
      %44 = arith.addf %38, %43 : vector<1x1xf32>
      %c0_19 = arith.constant 0 : index
      %c0_20 = arith.constant 0 : index
      %c0_21 = arith.constant 0 : index
      %45 = vector.load %arg6[%c0_19, %c0_20, %c0_21] : memref<1x1x1xf32, #tpu.memory_space<vmem>>, vector<1x1x1xf32>
      %46 = vector.shape_cast %45 : vector<1x1x1xf32> to vector<1x1xf32>
      %47 = vector.shape_cast %44 : vector<1x1xf32> to vector<1x1x1xf32>
      tpu.vector_store %arg6[%c0_19, %c0_20, %c0_21], %47 {strides = array<i32>} : memref<1x1x1xf32, #tpu.memory_space<vmem>>, vector<1x1x1xf32>,
      %c0_22 = arith.constant 0 : index
      %c0_23 = arith.constant 0 : index
      %c0_24 = arith.constant 0 : index
      %48 = vector.load %arg7[%c0_22, %c0_23, %c0_24] : memref<1x1x4xf32, #tpu.memory_space<vmem>>, vector<1x1x4xf32>
      %49 = vector.shape_cast %48 : vector<1x1x4xf32> to vector<1x4xf32>
      %cst_25 = arith.constant dense<0.000000e+00> : vector<4xf32>
      %50 = vector.multi_reduction <add>, %22, %cst_25 [0] : vector<8x4xf32> to vector<4xf32>
      %51 = vector.shape_cast %50 : vector<4xf32> to vector<1x4xf32>
      %52 = arith.addf %49, %51 : vector<1x4xf32>
      %c0_26 = arith.constant 0 : index
      %c0_27 = arith.constant 0 : index
      %c0_28 = arith.constant 0 : index
      %53 = vector.load %arg7[%c0_26, %c0_27, %c0_28] : memref<1x1x4xf32, #tpu.memory_space<vmem>>, vector<1x1x4xf32>
      %54 = vector.shape_cast %53 : vector<1x1x4xf32> to vector<1x4xf32>
      %55 = vector.shape_cast %52 : vector<1x4xf32> to vector<1x1x4xf32>
      tpu.vector_store %arg7[%c0_26, %c0_27, %c0_28], %55 {strides = array<i32>} : memref<1x1x4xf32, #tpu.memory_space<vmem>>, vector<1x1x4xf32>,
      %c0_29 = arith.constant 0 : index
      %c0_30 = arith.constant 0 : index
      %c0_31 = arith.constant 0 : index
      %56 = vector.load %arg8[%c0_29, %c0_30, %c0_31] : memref<1x1x4xf32, #tpu.memory_space<vmem>>, vector<1x1x4xf32>
      %57 = vector.shape_cast %56 : vector<1x1x4xf32> to vector<1x4xf32>
      %cst_32 = arith.constant 1.000000e+00 : f32
      %cst_33 = arith.constant 0.000000e+00 : f32
      %58 = vector.broadcast %cst_32 : f32 to vector<8x4xf32>
      %59 = vector.broadcast %cst_33 : f32 to vector<8x4xf32>
      %60 = arith.select %20, %58, %59 : vector<8x4xi1>, vector<8x4xf32>
      %cst_34 = arith.constant dense<0.000000e+00> : vector<4xf32>
      %61 = vector.multi_reduction <add>, %60, %cst_34 [0] : vector<8x4xf32> to vector<4xf32>
      %62 = vector.shape_cast %61 : vector<4xf32> to vector<1x4xf32>
      %63 = arith.addf %57, %62 : vector<1x4xf32>
      %c0_35 = arith.constant 0 : index
      %c0_36 = arith.constant 0 : index
      %c0_37 = arith.constant 0 : index
      %64 = vector.load %arg8[%c0_35, %c0_36, %c0_37] : memref<1x1x4xf32, #tpu.memory_space<vmem>>, vector<1x1x4xf32>
      %65 = vector.shape_cast %64 : vector<1x1x4xf32> to vector<1x4xf32>
      %66 = vector.shape_cast %63 : vector<1x4xf32> to vector<1x1x4xf32>
      tpu.vector_store %arg8[%c0_35, %c0_36, %c0_37], %66 {strides = array<i32>} : memref<1x1x4xf32, #tpu.memory_space<vmem>>, vector<1x1x4xf32>,
      %67 = vector.broadcast %6 : vector<1x4xf32> to vector<8x4xf32>
      %68 = arith.addf %3, %67 : vector<8x4xf32>
      %c0_38 = arith.constant 0 : index
      %c0_39 = arith.constant 0 : index
      %c0_40 = arith.constant 0 : index
      %69 = vector.load %arg9[%c0_38, %c0_39, %c0_40] : memref<1x1x4xf32, #tpu.memory_space<vmem>>, vector<1x1x4xf32>
      %70 = vector.shape_cast %69 : vector<1x1x4xf32> to vector<1x4xf32>
      %cst_41 = arith.constant dense<0xFF800000> : vector<4xf32>
      %71 = vector.multi_reduction <maximumf>, %68, %cst_41 [0] : vector<8x4xf32> to vector<4xf32>
      %72 = vector.shape_cast %71 : vector<4xf32> to vector<1x4xf32>
      %73 = arith.maximumf %70, %72 : vector<1x4xf32>
      %c0_42 = arith.constant 0 : index
      %c0_43 = arith.constant 0 : index
      %c0_44 = arith.constant 0 : index
      %74 = vector.load %arg10[%c0_42, %c0_43, %c0_44] : memref<1x1x4xf32, #tpu.memory_space<vmem>>, vector<1x1x4xf32>
      %75 = vector.shape_cast %74 : vector<1x1x4xf32> to vector<1x4xf32>
      %76 = arith.subf %70, %73 : vector<1x4xf32>
      %77 = math.exp %76 : vector<1x4xf32>
      %78 = arith.mulf %75, %77 : vector<1x4xf32>
      %79 = vector.broadcast %73 : vector<1x4xf32> to vector<8x4xf32>
      %80 = arith.subf %68, %79 : vector<8x4xf32>
      %81 = math.exp %80 : vector<8x4xf32>
      %cst_45 = arith.constant dense<0.000000e+00> : vector<4xf32>
      %82 = vector.multi_reduction <add>, %81, %cst_45 [0] : vector<8x4xf32> to vector<4xf32>
      %83 = vector.shape_cast %82 : vector<4xf32> to vector<1x4xf32>
      %84 = arith.addf %78, %83 : vector<1x4xf32>
      %c0_46 = arith.constant 0 : index
      %c0_47 = arith.constant 0 : index
      %c0_48 = arith.constant 0 : index
      %85 = vector.load %arg10[%c0_46, %c0_47, %c0_48] : memref<1x1x4xf32, #tpu.memory_space<vmem>>, vector<1x1x4xf32>
      %86 = vector.shape_cast %85 : vector<1x1x4xf32> to vector<1x4xf32>
      %87 = vector.shape_cast %84 : vector<1x4xf32> to vector<1x1x4xf32>
      tpu.vector_store %arg10[%c0_46, %c0_47, %c0_48], %87 {strides = array<i32>} : memref<1x1x4xf32, #tpu.memory_space<vmem>>, vector<1x1x4xf32>,
      %c0_49 = arith.constant 0 : index
      %c0_50 = arith.constant 0 : index
      %c0_51 = arith.constant 0 : index
      %88 = vector.load %arg9[%c0_49, %c0_50, %c0_51] : memref<1x1x4xf32, #tpu.memory_space<vmem>>, vector<1x1x4xf32>
      %89 = vector.shape_cast %88 : vector<1x1x4xf32> to vector<1x4xf32>
      %90 = vector.shape_cast %73 : vector<1x4xf32> to vector<1x1x4xf32>
      tpu.vector_store %arg9[%c0_49, %c0_50, %c0_51], %90 {strides = array<i32>} : memref<1x1x4xf32, #tpu.memory_space<vmem>>, vector<1x1x4xf32>,
    } else {
    }
    %true = arith.constant true
    %14 = arith.xori %11, %true : i1
    %15 = arith.extui %14 : i1 to i32
    %c0_i32_11 = arith.constant 0 : i32
    %16 = arith.cmpi ne, %15, %c0_i32_11 : i32
    scf.if %16 {
      %c8_i32_12 = arith.constant 8 : i32
      %17 = arith.muli %8, %c8_i32_12 : i32
      %18 = tpu.iota {dimensions = array<i32: 0>} : vector<8x1xi32>
      %19 = vector.broadcast %17 : i32 to vector<8x1xi32>
      %20 = arith.addi %19, %18 : vector<8x1xi32>
      %c8_i32_13 = arith.constant 8 : i32
      %21 = vector.broadcast %c8_i32_13 : i32 to vector<8x1xi32>
      %22 = arith.cmpi slt, %20, %21 : vector<8x1xi32>
      %23 = tpu.iota {dimensions = array<i32: 1>} : vector<1x4xi32>
      %24 = vector.broadcast %4 : vector<8x1xi32> to vector<8x4xi32>
      %25 = vector.broadcast %23 : vector<1x4xi32> to vector<8x4xi32>
      %26 = arith.cmpi eq, %24, %25 : vector<8x4xi32>
      %27 = vector.broadcast %22 : vector<8x1xi1> to vector<8x4xi1>
      %28 = arith.andi %26, %27 : vector<8x4xi1>
      %cst = arith.constant 0.000000e+00 : f32
      %29 = vector.broadcast %cst : f32 to vector<8x4xf32>
      %30 = arith.select %28, %3, %29 : vector<8x4xi1>, vector<8x4xf32>
      %31 = vector.broadcast %5 : vector<1x4xf32> to vector<8x4xf32>
      %32 = arith.addf %3, %31 : vector<8x4xf32>
      %cst_14 = arith.constant dense<0xFF800000> : vector<8xf32>
      %33 = vector.multi_reduction <maximumf>, %32, %cst_14 [1] : vector<8x4xf32> to vector<8xf32>
      %34 = vector.shape_cast %33 : vector<8xf32> to vector<8x1xf32>
      %35 = vector.broadcast %34 : vector<8x1xf32> to vector<8x4xf32>
      %36 = arith.subf %32, %35 : vector<8x4xf32>
      %37 = math.exp %36 : vector<8x4xf32>
      %cst_15 = arith.constant dense<0.000000e+00> : vector<8xf32>
      %38 = vector.multi_reduction <add>, %37, %cst_15 [1] : vector<8x4xf32> to vector<8xf32>
      %39 = vector.shape_cast %38 : vector<8xf32> to vector<8x1xf32>
      %40 = math.log %39 : vector<8x1xf32>
      %41 = arith.addf %34, %40 : vector<8x1xf32>
      %cst_16 = arith.constant dense<0.000000e+00> : vector<8xf32>
      %42 = vector.multi_reduction <add>, %30, %cst_16 [1] : vector<8x4xf32> to vector<8xf32>
      %43 = vector.shape_cast %42 : vector<8xf32> to vector<8x1xf32>
      %44 = arith.subf %41, %43 : vector<8x1xf32>
      %cst_17 = arith.constant 0.000000e+00 : f32
      %45 = vector.broadcast %cst_17 : f32 to vector<8x1xf32>
      %46 = arith.select %22, %44, %45 : vector<8x1xi1>, vector<8x1xf32>
      %c0_18 = arith.constant 0 : index
      %c0_19 = arith.constant 0 : index
      %c0_20 = arith.constant 0 : index
      %47 = vector.load %arg6[%c0_18, %c0_19, %c0_20] : memref<1x1x1xf32, #tpu.memory_space<vmem>>, vector<1x1x1xf32>
      %48 = vector.shape_cast %47 : vector<1x1x1xf32> to vector<1x1xf32>
      %49 = vector.shape_cast %46 : vector<8x1xf32> to vector<1x8x1xf32>
      %cst_21 = arith.constant dense<0.000000e+00> : vector<1xf32>
      %50 = vector.multi_reduction <add>, %49, %cst_21 [1, 2] : vector<1x8x1xf32> to vector<1xf32>
      %51 = vector.shape_cast %50 : vector<1xf32> to vector<1x1x1xf32>
      %52 = vector.extract %51[0, 0, 0] : f32 from vector<1x1x1xf32>
      %53 = vector.broadcast %52 : f32 to vector<1x1xf32>
      %54 = arith.addf %48, %53 : vector<1x1xf32>
      %c0_22 = arith.constant 0 : index
      %c0_23 = arith.constant 0 : index
      %c0_24 = arith.constant 0 : index
      %55 = vector.load %arg6[%c0_22, %c0_23, %c0_24] : memref<1x1x1xf32, #tpu.memory_space<vmem>>, vector<1x1x1xf32>
      %56 = vector.shape_cast %55 : vector<1x1x1xf32> to vector<1x1xf32>
      %57 = vector.shape_cast %54 : vector<1x1xf32> to vector<1x1x1xf32>
      tpu.vector_store %arg6[%c0_22, %c0_23, %c0_24], %57 {strides = array<i32>} : memref<1x1x1xf32, #tpu.memory_space<vmem>>, vector<1x1x1xf32>,
      %c0_25 = arith.constant 0 : index
      %c0_26 = arith.constant 0 : index
      %c0_27 = arith.constant 0 : index
      %58 = vector.load %arg7[%c0_25, %c0_26, %c0_27] : memref<1x1x4xf32, #tpu.memory_space<vmem>>, vector<1x1x4xf32>
      %59 = vector.shape_cast %58 : vector<1x1x4xf32> to vector<1x4xf32>
      %cst_28 = arith.constant dense<0.000000e+00> : vector<4xf32>
      %60 = vector.multi_reduction <add>, %30, %cst_28 [0] : vector<8x4xf32> to vector<4xf32>
      %61 = vector.shape_cast %60 : vector<4xf32> to vector<1x4xf32>
      %62 = arith.addf %59, %61 : vector<1x4xf32>
      %c0_29 = arith.constant 0 : index
      %c0_30 = arith.constant 0 : index
      %c0_31 = arith.constant 0 : index
      %63 = vector.load %arg7[%c0_29, %c0_30, %c0_31] : memref<1x1x4xf32, #tpu.memory_space<vmem>>, vector<1x1x4xf32>
      %64 = vector.shape_cast %63 : vector<1x1x4xf32> to vector<1x4xf32>
      %65 = vector.shape_cast %62 : vector<1x4xf32> to vector<1x1x4xf32>
      tpu.vector_store %arg7[%c0_29, %c0_30, %c0_31], %65 {strides = array<i32>} : memref<1x1x4xf32, #tpu.memory_space<vmem>>, vector<1x1x4xf32>,
      %c0_32 = arith.constant 0 : index
      %c0_33 = arith.constant 0 : index
      %c0_34 = arith.constant 0 : index
      %66 = vector.load %arg8[%c0_32, %c0_33, %c0_34] : memref<1x1x4xf32, #tpu.memory_space<vmem>>, vector<1x1x4xf32>
      %67 = vector.shape_cast %66 : vector<1x1x4xf32> to vector<1x4xf32>
      %cst_35 = arith.constant 1.000000e+00 : f32
      %cst_36 = arith.constant 0.000000e+00 : f32
      %68 = vector.broadcast %cst_35 : f32 to vector<8x4xf32>
      %69 = vector.broadcast %cst_36 : f32 to vector<8x4xf32>
      %70 = arith.select %28, %68, %69 : vector<8x4xi1>, vector<8x4xf32>
      %cst_37 = arith.constant dense<0.000000e+00> : vector<4xf32>
      %71 = vector.multi_reduction <add>, %70, %cst_37 [0] : vector<8x4xf32> to vector<4xf32>
      %72 = vector.shape_cast %71 : vector<4xf32> to vector<1x4xf32>
      %73 = arith.addf %67, %72 : vector<1x4xf32>
      %c0_38 = arith.constant 0 : index
      %c0_39 = arith.constant 0 : index
      %c0_40 = arith.constant 0 : index
      %74 = vector.load %arg8[%c0_38, %c0_39, %c0_40] : memref<1x1x4xf32, #tpu.memory_space<vmem>>, vector<1x1x4xf32>
      %75 = vector.shape_cast %74 : vector<1x1x4xf32> to vector<1x4xf32>
      %76 = vector.shape_cast %73 : vector<1x4xf32> to vector<1x1x4xf32>
      tpu.vector_store %arg8[%c0_38, %c0_39, %c0_40], %76 {strides = array<i32>} : memref<1x1x4xf32, #tpu.memory_space<vmem>>, vector<1x1x4xf32>,
      %77 = vector.broadcast %6 : vector<1x4xf32> to vector<8x4xf32>
      %78 = arith.addf %3, %77 : vector<8x4xf32>
      %cst_41 = arith.constant -1.000000e+30 : f32
      %79 = vector.shape_cast %22 : vector<8x1xi1> to vector<8x1xi1>
      %80 = vector.broadcast %79 : vector<8x1xi1> to vector<8x4xi1>
      %81 = vector.broadcast %cst_41 : f32 to vector<8x4xf32>
      %82 = arith.select %80, %78, %81 : vector<8x4xi1>, vector<8x4xf32>
      %c0_42 = arith.constant 0 : index
      %c0_43 = arith.constant 0 : index
      %c0_44 = arith.constant 0 : index
      %83 = vector.load %arg9[%c0_42, %c0_43, %c0_44] : memref<1x1x4xf32, #tpu.memory_space<vmem>>, vector<1x1x4xf32>
      %84 = vector.shape_cast %83 : vector<1x1x4xf32> to vector<1x4xf32>
      %cst_45 = arith.constant dense<0xFF800000> : vector<4xf32>
      %85 = vector.multi_reduction <maximumf>, %82, %cst_45 [0] : vector<8x4xf32> to vector<4xf32>
      %86 = vector.shape_cast %85 : vector<4xf32> to vector<1x4xf32>
      %87 = arith.maximumf %84, %86 : vector<1x4xf32>
      %c0_46 = arith.constant 0 : index
      %c0_47 = arith.constant 0 : index
      %c0_48 = arith.constant 0 : index
      %88 = vector.load %arg10[%c0_46, %c0_47, %c0_48] : memref<1x1x4xf32, #tpu.memory_space<vmem>>, vector<1x1x4xf32>
      %89 = vector.shape_cast %88 : vector<1x1x4xf32> to vector<1x4xf32>
      %90 = arith.subf %84, %87 : vector<1x4xf32>
      %91 = math.exp %90 : vector<1x4xf32>
      %92 = arith.mulf %89, %91 : vector<1x4xf32>
      %93 = vector.broadcast %87 : vector<1x4xf32> to vector<8x4xf32>
      %94 = arith.subf %82, %93 : vector<8x4xf32>
      %95 = math.exp %94 : vector<8x4xf32>
      %cst_49 = arith.constant dense<0.000000e+00> : vector<4xf32>
      %96 = vector.multi_reduction <add>, %95, %cst_49 [0] : vector<8x4xf32> to vector<4xf32>
      %97 = vector.shape_cast %96 : vector<4xf32> to vector<1x4xf32>
      %98 = arith.addf %92, %97 : vector<1x4xf32>
      %c0_50 = arith.constant 0 : index
      %c0_51 = arith.constant 0 : index
      %c0_52 = arith.constant 0 : index
      %99 = vector.load %arg10[%c0_50, %c0_51, %c0_52] : memref<1x1x4xf32, #tpu.memory_space<vmem>>, vector<1x1x4xf32>
      %100 = vector.shape_cast %99 : vector<1x1x4xf32> to vector<1x4xf32>
      %101 = vector.shape_cast %98 : vector<1x4xf32> to vector<1x1x4xf32>
      tpu.vector_store %arg10[%c0_50, %c0_51, %c0_52], %101 {strides = array<i32>} : memref<1x1x4xf32, #tpu.memory_space<vmem>>, vector<1x1x4xf32>,
      %c0_53 = arith.constant 0 : index
      %c0_54 = arith.constant 0 : index
      %c0_55 = arith.constant 0 : index
      %102 = vector.load %arg9[%c0_53, %c0_54, %c0_55] : memref<1x1x4xf32, #tpu.memory_space<vmem>>, vector<1x1x4xf32>
      %103 = vector.shape_cast %102 : vector<1x1x4xf32> to vector<1x4xf32>
      %104 = vector.shape_cast %87 : vector<1x4xf32> to vector<1x1x4xf32>
      tpu.vector_store %arg9[%c0_53, %c0_54, %c0_55], %104 {strides = array<i32>} : memref<1x1x4xf32, #tpu.memory_space<vmem>>, vector<1x1x4xf32>,
    } else {
    }
    return
  }
  func.func @transform_0(%arg0: i32, %arg1: i32) -> (i32, i32) {
    %c1_i32 = arith.constant 1 : i32
    %0 = arith.muli %arg0, %c1_i32 : i32
    %1 = arith.addi %0, %arg1 : i32
    %c0_i32 = arith.constant 0 : i32
    %2 = arith.minsi %1, %c0_i32 : i32
    %c0_i32_0 = arith.constant 0 : i32
    %c0_i32_1 = arith.constant 0 : i32
    return %2, %c0_i32_0 : i32, i32
  }
  func.func @transform_1(%arg0: i32, %arg1: i32) -> (i32, i32) {
    %c1_i32 = arith.constant 1 : i32
    %0 = arith.muli %arg0, %c1_i32 : i32
    %1 = arith.addi %0, %arg1 : i32
    %c0_i32 = arith.constant 0 : i32
    %2 = arith.minsi %1, %c0_i32 : i32
    %c0_i32_0 = arith.constant 0 : i32
    %c0_i32_1 = arith.constant 0 : i32
    return %2, %c0_i32_0 : i32, i32
  }
  func.func @transform_2(%arg0: i32, %arg1: i32) -> (i32, i32) {
    %c0_i32 = arith.constant 0 : i32
    %c0_i32_0 = arith.constant 0 : i32
    %c0_i32_1 = arith.constant 0 : i32
    return %c0_i32, %c0_i32_0 : i32, i32
  }
  func.func @transform_3(%arg0: i32, %arg1: i32) -> (i32, i32) {
    %c0_i32 = arith.constant 0 : i32
    %c0_i32_0 = arith.constant 0 : i32
    %c0_i32_1 = arith.constant 0 : i32
    return %c0_i32, %c0_i32_0 : i32, i32
  }
  func.func @transform_4(%arg0: i32, %arg1: i32) -> (i32, i32, i32) {
    %c0_i32 = arith.constant 0 : i32
    %c0_i32_0 = arith.constant 0 : i32
    %c0_i32_1 = arith.constant 0 : i32
    return %arg0, %c0_i32, %c0_i32_0 : i32, i32, i32
  }
  func.func @transform_5(%arg0: i32, %arg1: i32) -> (i32, i32, i32) {
    %c0_i32 = arith.constant 0 : i32
    %c0_i32_0 = arith.constant 0 : i32
    %c0_i32_1 = arith.constant 0 : i32
    return %arg0, %c0_i32, %c0_i32_0 : i32, i32, i32
  }
  func.func @transform_6(%arg0: i32, %arg1: i32) -> (i32, i32, i32) {
    %c0_i32 = arith.constant 0 : i32
    %c0_i32_0 = arith.constant 0 : i32
    %c0_i32_1 = arith.constant 0 : i32
    return %arg0, %c0_i32, %c0_i32_0 : i32, i32, i32
  }
  func.func @transform_7(%arg0: i32, %arg1: i32) -> (i32, i32, i32) {
    %c0_i32 = arith.constant 0 : i32
    %c0_i32_0 = arith.constant 0 : i32
    %c0_i32_1 = arith.constant 0 : i32
    return %arg0, %c0_i32, %c0_i32_0 : i32, i32, i32
  }
  func.func @transform_8(%arg0: i32, %arg1: i32) -> (i32, i32, i32) {
    %c0_i32 = arith.constant 0 : i32
    %c0_i32_0 = arith.constant 0 : i32
    %c0_i32_1 = arith.constant 0 : i32
    return %arg0, %c0_i32, %c0_i32_0 : i32, i32, i32
  }
}

</mosaic_0001>

<llo_original>
// kernel: unified_loss_pallas.1
$region0: #{unified_loss_pallas.1}
  #allocation0 [shape = 'u32[]', space=smem, size = 0x4, offset = 0x4, fixed_abs, tag = 'smem constant byte address 0x4 - core index']
  #allocation1 [shape = 'u32[144,128]{1,0:T(1,128)}', space=vmem, size = 0x12000, scoped, tag = 'internal scratch']
  %s0 = inlined_call_operand.vmem [shape: f32[8,4], index: 0, kind: input, shape index: {}]
  %s1 = inlined_call_operand.vmem [shape: s32[8,1], index: 1, kind: input, shape index: {}]
  %s2 = inlined_call_operand.vmem [shape: f32[1,4], index: 2, kind: input, shape index: {}]
  %s3 = inlined_call_operand.vmem [shape: f32[1,4], index: 3, kind: input, shape index: {}]
  %s4 = inlined_call_operand.vmem [shape: f32[2,1,1], index: 4, kind: output, shape index: {0}]
  %s5 = inlined_call_operand.vmem [shape: f32[2,1,4], index: 5, kind: output, shape index: {1}]
  %s6 = inlined_call_operand.vmem [shape: f32[2,1,4], index: 6, kind: output, shape index: {2}]
  %s7 = inlined_call_operand.vmem [shape: f32[2,1,4], index: 7, kind: output, shape index: {3}]
  %s8 = inlined_call_operand.vmem [shape: f32[2,1,4], index: 8, kind: output, shape index: {4}]
  %9 = xla_tuple %s4, %s5, %s6, %s7, %s8
  %s10 = sld [smem:[#allocation0]]
  $region93: #{unified_loss_pallas.1} parent=0
    _
  %s12 = ssub.s32 1, %s10
  %s13 = scalar_select 0, %s12, %s10
  loop: start=0, step=1, limit=4
  $region2: #{unified_loss_pallas.1} parent=0 // loop_pre_header
    _
  $region3: #{unified_loss_pallas.1} parent=0 // loop_header
    %s15 = sphi 0, %s19
    %p16 = scmp.ge.s32.totalorder %s15, 4
    %s22 = sphi 0, %s34
    %s23 = sphi 0, %s30
    %s24 = sphi 0, %s22
    %s25 = sphi 0, %s23
    %s26 = sphi 0, %s24
    %s27 = sphi 0, %s25
    %s43 = sphi 0, %s45
    %s46 = sphi 0, %s43
    %s47 = sphi 0, %s46
    %s63 = sphi 0, %s47
    %s75 = sphi 0, %s77
    %s78 = sphi 0, %s75
    %s79 = sphi 0, %s78
    %s95 = sphi 0, %s79
    %s99 = sphi 0, %s99
    %s101 = sphi 0, %s99
    %s102 = sphi 0, %s101
    %s116 = sphi 0, %s102
    %s120 = sphi 0, %s120
    %s122 = sphi 0, %s120
    %s123 = sphi 0, %s122
    %s137 = sphi 0, %s123
    %s143 = sphi 0, %s145
    %s146 = sphi 0, %s143
    %s147 = sphi 0, %s146
    %s163 = sphi 0, %s147
    %s169 = sphi 0, %s171
    %s172 = sphi 0, %s169
    %s173 = sphi 0, %s172
    %s189 = sphi 0, %s173
    %s195 = sphi 0, %s197
    %s198 = sphi 0, %s195
    %s199 = sphi 0, %s198
    %s215 = sphi 0, %s199
    %s221 = sphi 0, %s223
    %s224 = sphi 0, %s221
    %s225 = sphi 0, %s224
    %s241 = sphi 0, %s225
    %s247 = sphi 0, %s249
    %s250 = sphi 0, %s247
    %s251 = sphi 0, %s250
    %s267 = sphi 0, %s251
  $region4: #{unified_loss_pallas.1} parent=0 // loop_header_branch
    %18 = sbr.rel (%p16) target = $region8
  $region5: #{unified_loss_pallas.1} parent=0 // loop_body
    %s20 = ssub.s32 %s15, 1
    %s21 = ssub.s32 %s15, 2
    %s28 = sadd.s32 1, %s23
    %p29 = scmp.ge.s32.totalorder %s28, 1
    %s30 = scalar_select %p29, 0, %s28
    %s31 = sadd.s32 1, %s22
    %s32 = scalar_select %p29, %s31, %s22
    %p33 = scmp.ge.s32.totalorder %s32, 2
    %s34 = scalar_select %p33, 0, %s32
    %s35 = sadd.s32 %s22, %s23
    %p36 = scmp.lt.s32.totalorder %s35, 0
    %s37 = scalar_select %p36, %s35, 0
    %s38 = sadd.s32 %s34, %s30
    %p39 = scmp.lt.s32.totalorder %s38, 0
    %s40 = scalar_select %p39, %s38, 0
    %s41 = ssub.s32 %s37, %s40
    %p42 = scmp.eq.s32.totalorder %s41, 0
    %s44 = sadd.s32 %s43, 1
    %s45 = scalar_select %p42, %s43, %s44
    %p48 = pneg %p42
    %p49 = scmp.eq.s32.totalorder %s15, 1
    %p50 = por %p48, %p49
    %p51 = scmp.ne.s32.totalorder %s43, %s46
    %p52 = scmp.eq.s32.totalorder %s15, 0
    %p53 = por %p51, %p52
    %p54 = scmp.ne.s32.totalorder %s43, %s46
    %p55 = scmp.eq.s32.totalorder %s20, 1
    %p56 = por %p54, %p55
    %p57 = scmp.ne.s32.totalorder %s46, %s47
    %p58 = scmp.eq.s32.totalorder %s20, 0
    %p59 = por %p57, %p58
    %p60 = scmp.ne.s32.totalorder %s46, %s47
    %p61 = scmp.eq.s32.totalorder %s21, 1
    %p62 = por %p60, %p61
    %p64 = scmp.ne.s32.totalorder %s47, %s63
    %p65 = scmp.eq.s32.totalorder %s21, 0
    %p66 = por %p64, %p65
    %s67 = sadd.s32 %s22, %s23
    %p68 = scmp.lt.s32.totalorder %s67, 0
    %s69 = scalar_select %p68, %s67, 0
    %s70 = sadd.s32 %s34, %s30
    %p71 = scmp.lt.s32.totalorder %s70, 0
    %s72 = scalar_select %p71, %s70, 0
    %s73 = ssub.s32 %s69, %s72
    %p74 = scmp.eq.s32.totalorder %s73, 0
    %s76 = sadd.s32 %s75, 1
    %s77 = scalar_select %p74, %s75, %s76
    %p80 = pneg %p74
    %p81 = scmp.eq.s32.totalorder %s15, 1
    %p82 = por %p80, %p81
    %p83 = scmp.ne.s32.totalorder %s75, %s78
    %p84 = scmp.eq.s32.totalorder %s15, 0
    %p85 = por %p83, %p84
    %p86 = scmp.ne.s32.totalorder %s75, %s78
    %p87 = scmp.eq.s32.totalorder %s20, 1
    %p88 = por %p86, %p87
    %p89 = scmp.ne.s32.totalorder %s78, %s79
    %p90 = scmp.eq.s32.totalorder %s20, 0
    %p91 = por %p89, %p90
    %p92 = scmp.ne.s32.totalorder %s78, %s79
    %p93 = scmp.eq.s32.totalorder %s21, 1
    %p94 = por %p92, %p93
    %p96 = scmp.ne.s32.totalorder %s79, %s95
    %p97 = scmp.eq.s32.totalorder %s21, 0
    %p98 = por %p96, %p97
    %s100 = sadd.s32 %s99, 1
    %p103 = scmp.eq.s32.totalorder %s15, 1
    %p104 = scmp.ne.s32.totalorder %s99, %s101
    %p105 = scmp.eq.s32.totalorder %s15, 0
    %p106 = por %p104, %p105
    %p107 = scmp.ne.s32.totalorder %s99, %s101
    %p108 = scmp.eq.s32.totalorder %s20, 1
    %p109 = por %p107, %p108
    %p110 = scmp.ne.s32.totalorder %s101, %s102
    %p111 = scmp.eq.s32.totalorder %s20, 0
    %p112 = por %p110, %p111
    %p113 = scmp.ne.s32.totalorder %s101, %s102
    %p114 = scmp.eq.s32.totalorder %s21, 1
    %p115 = por %p113, %p114
    %p117 = scmp.ne.s32.totalorder %s102, %s116
    %p118 = scmp.eq.s32.totalorder %s21, 0
    %p119 = por %p117, %p118
    %s121 = sadd.s32 %s120, 1
    %p124 = scmp.eq.s32.totalorder %s15, 1
    %p125 = scmp.ne.s32.totalorder %s120, %s122
    %p126 = scmp.eq.s32.totalorder %s15, 0
    %p127 = por %p125, %p126
    %p128 = scmp.ne.s32.totalorder %s120, %s122
    %p129 = scmp.eq.s32.totalorder %s20, 1
    %p130 = por %p128, %p129
    %p131 = scmp.ne.s32.totalorder %s122, %s123
    %p132 = scmp.eq.s32.totalorder %s20, 0
    %p133 = por %p131, %p132
    %p134 = scmp.ne.s32.totalorder %s122, %s123
    %p135 = scmp.eq.s32.totalorder %s21, 1
    %p136 = por %p134, %p135
    %p138 = scmp.ne.s32.totalorder %s123, %s137
    %p139 = scmp.eq.s32.totalorder %s21, 0
    %p140 = por %p138, %p139
    %s141 = ssub.s32 %s22, %s34
    %p142 = scmp.eq.s32.totalorder %s141, 0
    %s144 = sadd.s32 %s143, 1
    %s145 = scalar_select %p142, %s143, %s144
    %p148 = pneg %p142
    %p149 = scmp.eq.s32.totalorder %s15, 1
    %p150 = por %p148, %p149
    %p151 = scmp.ne.s32.totalorder %s143, %s146
    %p152 = scmp.eq.s32.totalorder %s15, 0
    %p153 = por %p151, %p152
    %p154 = scmp.ne.s32.totalorder %s143, %s146
    %p155 = scmp.eq.s32.totalorder %s20, 1
    %p156 = por %p154, %p155
    %p157 = scmp.ne.s32.totalorder %s146, %s147
    %p158 = scmp.eq.s32.totalorder %s20, 0
    %p159 = por %p157, %p158
    %p160 = scmp.ne.s32.totalorder %s146, %s147
    %p161 = scmp.eq.s32.totalorder %s21, 1
    %p162 = por %p160, %p161
    %p164 = scmp.ne.s32.totalorder %s147, %s163
    %p165 = scmp.eq.s32.totalorder %s21, 0
    %p166 = por %p164, %p165
    %s167 = ssub.s32 %s22, %s34
    %p168 = scmp.eq.s32.totalorder %s167, 0
    %s170 = sadd.s32 %s169, 1
    %s171 = scalar_select %p168, %s169, %s170
    %p174 = pneg %p168
    %p175 = scmp.eq.s32.totalorder %s15, 1
    %p176 = por %p174, %p175
    %p177 = scmp.ne.s32.totalorder %s169, %s172
    %p178 = scmp.eq.s32.totalorder %s15, 0
    %p179 = por %p177, %p178
    %p180 = scmp.ne.s32.totalorder %s169, %s172
    %p181 = scmp.eq.s32.totalorder %s20, 1
    %p182 = por %p180, %p181
    %p183 = scmp.ne.s32.totalorder %s172, %s173
    %p184 = scmp.eq.s32.totalorder %s20, 0
    %p185 = por %p183, %p184
    %p186 = scmp.ne.s32.totalorder %s172, %s173
    %p187 = scmp.eq.s32.totalorder %s21, 1
    %p188 = por %p186, %p187
    %p190 = scmp.ne.s32.totalorder %s173, %s189
    %p191 = scmp.eq.s32.totalorder %s21, 0
    %p192 = por %p190, %p191
    %s193 = ssub.s32 %s22, %s34
    %p194 = scmp.eq.s32.totalorder %s193, 0
    %s196 = sadd.s32 %s195, 1
    %s197 = scalar_select %p194, %s195, %s196
    %p200 = pneg %p194
    %p201 = scmp.eq.s32.totalorder %s15, 1
    %p202 = por %p200, %p201
    %p203 = scmp.ne.s32.totalorder %s195, %s198
    %p204 = scmp.eq.s32.totalorder %s15, 0
    %p205 = por %p203, %p204
    %p206 = scmp.ne.s32.totalorder %s195, %s198
    %p207 = scmp.eq.s32.totalorder %s20, 1
    %p208 = por %p206, %p207
    %p209 = scmp.ne.s32.totalorder %s198, %s199
    %p210 = scmp.eq.s32.totalorder %s20, 0
    %p211 = por %p209, %p210
    %p212 = scmp.ne.s32.totalorder %s198, %s199
    %p213 = scmp.eq.s32.totalorder %s21, 1
    %p214 = por %p212, %p213
    %p216 = scmp.ne.s32.totalorder %s199, %s215
    %p217 = scmp.eq.s32.totalorder %s21, 0
    %p218 = por %p216, %p217
    %s219 = ssub.s32 %s22, %s34
    %p220 = scmp.eq.s32.totalorder %s219, 0
    %s222 = sadd.s32 %s221, 1
    %s223 = scalar_select %p220, %s221, %s222
    %p226 = pneg %p220
    %p227 = scmp.eq.s32.totalorder %s15, 1
    %p228 = por %p226, %p227
    %p229 = scmp.ne.s32.totalorder %s221, %s224
    %p230 = scmp.eq.s32.totalorder %s15, 0
    %p231 = por %p229, %p230
    %p232 = scmp.ne.s32.totalorder %s221, %s224
    %p233 = scmp.eq.s32.totalorder %s20, 1
    %p234 = por %p232, %p233
    %p235 = scmp.ne.s32.totalorder %s224, %s225
    %p236 = scmp.eq.s32.totalorder %s20, 0
    %p237 = por %p235, %p236
    %p238 = scmp.ne.s32.totalorder %s224, %s225
    %p239 = scmp.eq.s32.totalorder %s21, 1
    %p240 = por %p238, %p239
    %p242 = scmp.ne.s32.totalorder %s225, %s241
    %p243 = scmp.eq.s32.totalorder %s21, 0
    %p244 = por %p242, %p243
    %s245 = ssub.s32 %s22, %s34
    %p246 = scmp.eq.s32.totalorder %s245, 0
    %s248 = sadd.s32 %s247, 1
    %s249 = scalar_select %p246, %s247, %s248
    %p252 = pneg %p246
    %p253 = scmp.eq.s32.totalorder %s15, 1
    %p254 = por %p252, %p253
    %p255 = scmp.ne.s32.totalorder %s247, %s250
    %p256 = scmp.eq.s32.totalorder %s15, 0
    %p257 = por %p255, %p256
    %p258 = scmp.ne.s32.totalorder %s247, %s250
    %p259 = scmp.eq.s32.totalorder %s20, 1
    %p260 = por %p258, %p259
    %p261 = scmp.ne.s32.totalorder %s250, %s251
    %p262 = scmp.eq.s32.totalorder %s20, 0
    %p263 = por %p261, %p262
    %p264 = scmp.ne.s32.totalorder %s250, %s251
    %p265 = scmp.eq.s32.totalorder %s21, 1
    %p266 = por %p264, %p265
    %p268 = scmp.ne.s32.totalorder %s251, %s267
    %p269 = scmp.eq.s32.totalorder %s21, 0
    %p270 = por %p268, %p269
    %p271 = scmp.le.s32.totalorder 1, %s15
    %p272 = scmp.lt.s32.totalorder %s15, 3
    %p273 = pnand %p271, %p272
    %p274 = pneg %p273
    // Predicated region
    $region9: #{unified_loss_pallas.1} parent=5 // pred_check
      _
    $region10: #{unified_loss_pallas.1} parent=5 // pred_check_branch
      %276 = sbr.rel (%p273) target = $region12
    $region11: #{unified_loss_pallas.1} parent=5 // pred_region
      %s277 = ssub.s32 %s15, 1
      // Predicated region
      $region13: #{unified_loss_pallas.1} parent=11 // pred_check
        %p278 = pneg %p112
      $region14: #{unified_loss_pallas.1} parent=11 // pred_check_branch
        %280 = sbr.rel (%p278) target = $region16
      $region15: #{unified_loss_pallas.1} parent=11 // pred_region
        _
      $region16: #{unified_loss_pallas.1} parent=11 // pred_fallthru
        _
      // Predicated region
      $region17: #{unified_loss_pallas.1} parent=11 // pred_check
        %p281 = pneg %p133
      $region18: #{unified_loss_pallas.1} parent=11 // pred_check_branch
        %283 = sbr.rel (%p281) target = $region20
      $region19: #{unified_loss_pallas.1} parent=11 // pred_region
        _
      $region20: #{unified_loss_pallas.1} parent=11 // pred_fallthru
        _
    $region12: #{unified_loss_pallas.1} parent=5 // pred_fallthru
      _
    %p284 = scmp.lt.s32.totalorder %s15, 2
    // Predicated region
    $region21: #{unified_loss_pallas.1} parent=5 // pred_check
      %p285 = pneg %p284
    $region22: #{unified_loss_pallas.1} parent=5 // pred_check_branch
      %287 = sbr.rel (%p285) target = $region24
    $region23: #{unified_loss_pallas.1} parent=5 // pred_region
      // Predicated region
      $region25: #{unified_loss_pallas.1} parent=23 // pred_check
        %p288 = pneg %p53
      $region26: #{unified_loss_pallas.1} parent=23 // pred_check_branch
        %290 = sbr.rel (%p288) target = $region28
      $region27: #{unified_loss_pallas.1} parent=23 // pred_region
        %s291 = sadd.s32 %s22, %s23
        %p292 = scmp.lt.s32.totalorder %s291, 0
        %s293 = scalar_select %p292, %s291, 0
        %p294 = scmp.lt.s32.totalorder %s293, 0
        %s295 = scalar_select %p294, %s293, 0
        %s296 = smul.addr %s295, 8
        %s297 = scalar_lea.vmem %s0, %s296
        %s298 = sadd.s32 %s22, %s23
        %p299 = scmp.lt.s32.totalorder %s298, 0
        %s300 = scalar_select %p299, %s298, 0
      $region28: #{unified_loss_pallas.1} parent=23 // pred_fallthru
        _
      // Predicated region
      $region29: #{unified_loss_pallas.1} parent=23 // pred_check
        %p301 = pneg %p85
      $region30: #{unified_loss_pallas.1} parent=23 // pred_check_branch
        %303 = sbr.rel (%p301) target = $region32
      $region31: #{unified_loss_pallas.1} parent=23 // pred_region
        %s304 = sadd.s32 %s22, %s23
        %p305 = scmp.lt.s32.totalorder %s304, 0
        %s306 = scalar_select %p305, %s304, 0
        %p307 = scmp.lt.s32.totalorder %s306, 0
        %s308 = scalar_select %p307, %s306, 0
        %s309 = smul.addr %s308, 8
        %s310 = scalar_lea.vmem %s1, %s309
        %s311 = sadd.s32 %s22, %s23
        %p312 = scmp.lt.s32.totalorder %s311, 0
        %s313 = scalar_select %p312, %s311, 0
      $region32: #{unified_loss_pallas.1} parent=23 // pred_fallthru
        _
    $region24: #{unified_loss_pallas.1} parent=5 // pred_fallthru
      _
    %p314 = scmp.le.s32.totalorder 1, %s15
    %p315 = scmp.lt.s32.totalorder %s15, 3
    %p316 = pnand %p314, %p315
    %p317 = pneg %p316
    // Predicated region
    $region33: #{unified_loss_pallas.1} parent=5 // pred_check
      _
    $region34: #{unified_loss_pallas.1} parent=5 // pred_check_branch
      %319 = sbr.rel (%p316) target = $region36
    $region35: #{unified_loss_pallas.1} parent=5 // pred_region
      %s320 = ssub.s32 %s15, 1
      %s321 = sadd.s32 %s24, %s25
      %p322 = scmp.lt.s32.totalorder %s321, 0
      %s323 = scalar_select %p322, %s321, 0
      %p324 = scmp.lt.s32.totalorder %s323, 0
      %s325 = scalar_select %p324, %s323, 0
      %s326 = smul.addr %s325, 8
      %s327 = scalar_lea.vmem %s0, %s326
      %p328 = pneg %p59
      %p329 = pneg %p56
      %s330 = sadd.s32 %s24, %s25
      %p331 = scmp.lt.s32.totalorder %s330, 0
      %s332 = scalar_select %p331, %s330, 0
      %p333 = scmp.lt.s32.totalorder %s332, 0
      %s334 = scalar_select %p333, %s332, 0
      %s335 = smul.addr %s334, 8
      %s336 = scalar_lea.vmem %s1, %s335
      %p337 = pneg %p91
      %p338 = pneg %p88
      %p339 = pneg %p112
      %p340 = pneg %p109
      %p341 = pneg %p133
      %p342 = pneg %p130
      %p343 = pneg %p159
      %p344 = pneg %p156
      %p345 = scmp.lt.s32.totalorder %s24, 1
      %s346 = scalar_select %p345, %s24, 1
      %s347 = scalar_lea.vmem %s4, %s346
      %p348 = pneg %p185
      %p349 = pneg %p182
      %p350 = scmp.lt.s32.totalorder %s24, 1
      %s351 = scalar_select %p350, %s24, 1
      %s352 = scalar_lea.vmem %s5, %s351
      %p353 = pneg %p211
      %p354 = pneg %p208
      %p355 = scmp.lt.s32.totalorder %s24, 1
      %s356 = scalar_select %p355, %s24, 1
      %s357 = scalar_lea.vmem %s6, %s356
      %p358 = pneg %p237
      %p359 = pneg %p234
      %p360 = scmp.lt.s32.totalorder %s24, 1
      %s361 = scalar_select %p360, %s24, 1
      %s362 = scalar_lea.vmem %s7, %s361
      %p363 = pneg %p263
      %p364 = pneg %p260
      %p365 = scmp.lt.s32.totalorder %s24, 1
      %s366 = scalar_select %p365, %s24, 1
      %s367 = scalar_lea.vmem %s8, %s366
      %s368 = sadd.s32 %s24, %s25
      %p369 = scmp.lt.s32.totalorder %s368, 0
      %s370 = scalar_select %p369, %s368, 0
      %p371 = scmp.lt.s32.totalorder %s370, 0
      %s372 = scalar_select %p371, %s370, 0
      %s373 = smul.addr %s372, 8
      %s374 = scalar_lea.vmem %s0, %s373
      %s375 = sadd.s32 %s24, %s25
      %p376 = scmp.lt.s32.totalorder %s375, 0
      %s377 = scalar_select %p376, %s375, 0
      %s378 = sadd.s32 %s24, %s25
      %p379 = scmp.lt.s32.totalorder %s378, 0
      %s380 = scalar_select %p379, %s378, 0
      %p381 = scmp.lt.s32.totalorder %s380, 0
      %s382 = scalar_select %p381, %s380, 0
      %s383 = smul.addr %s382, 8
      %s384 = scalar_lea.vmem %s1, %s383
      %s385 = sadd.s32 %s24, %s25
      %p386 = scmp.lt.s32.totalorder %s385, 0
      %s387 = scalar_select %p386, %s385, 0
      %p388 = scmp.lt.s32.totalorder %s24, 1
      %s389 = scalar_select %p388, %s24, 1
      %s390 = scalar_lea.vmem %s4, %s389
      %p391 = scmp.lt.s32.totalorder %s24, 1
      %s392 = scalar_select %p391, %s24, 1
      %s393 = scalar_lea.vmem %s5, %s392
      %p394 = scmp.lt.s32.totalorder %s24, 1
      %s395 = scalar_select %p394, %s24, 1
      %s396 = scalar_lea.vmem %s6, %s395
      %p397 = scmp.lt.s32.totalorder %s24, 1
      %s398 = scalar_select %p397, %s24, 1
      %s399 = scalar_lea.vmem %s7, %s398
      %p400 = scmp.lt.s32.totalorder %s24, 1
      %s401 = scalar_select %p400, %s24, 1
      %s402 = scalar_lea.vmem %s8, %s401
      %p403 = scmp.eq.s32.totalorder %s25, 0
      // Predicated region
      $region37: #{unified_loss_pallas.1} parent=35 // pred_check
        %p404 = pneg %p403
      $region38: #{unified_loss_pallas.1} parent=35 // pred_check_branch
        %406 = sbr.rel (%p404) target = $region40
      $region39: #{unified_loss_pallas.1} parent=35 // pred_region
        %vm407 = vcmask 0
        %408 = vst.msk [vmem:[%s390] sm:$0x1] %vm407, 0.0
        %vm409 = vcmask 24576
        %410 = vst.msk [vmem:[%s393] sm:$0x1] %vm409, 0.0
        %411 = vst.msk [vmem:[%s396] sm:$0x1] %vm409, 0.0
        %412 = vst.msk [vmem:[%s399] sm:$0x1] %vm409, -1e+30
        %413 = vst.msk [vmem:[%s402] sm:$0x1] %vm409, 0.0
      $region40: #{unified_loss_pallas.1} parent=35 // pred_fallthru
        _
      %v414 = vld [vmem:[%s374] sm:$0xff]
      %v415 = vld [vmem:[%s384] sm:$0xff]
      %v416 = vld [vmem:[%s2] sm:$0x1]
      %v417 = vld [vmem:[%s3] sm:$0x1]
      %s418 = sadd.s32 %s24, %s25
      %s419 = sadd.s32 %s418, 1
      %s420 = smul.u32 %s419, 8
      %p421 = scmp.le.s32.totalorder %s420, 8
      // Predicated region
      $region41: #{unified_loss_pallas.1} parent=35 // pred_check
        %p422 = pneg %p421
      $region42: #{unified_loss_pallas.1} parent=35 // pred_check_branch
        %424 = sbr.rel (%p422) target = $region44
      $region43: #{unified_loss_pallas.1} parent=35 // pred_region
        %v425 = vlaneseq
        %v426 = vand.u32 %v425, 127
        %427 = vset.pattern.permute.xlu0 0
        %428 = vperm.xlu0 %427, %v415
        %v429 = vpop.permute.xlu0 %428
        %vm430 = vcmp.eq.s32.totalorder %v429, %v426
        %v431 = vsel %vm430, %v414, 0.0
        %v433 = vlaneseq
        %v434 = vshrl.u32 %v433, 7
        %v435 = vsub.s32 0, %v434
        %v436 = vrot.slane %v416, %v435
        %v438 = vadd.f32 %v414, %v436
        %vm439 = vcmask 31744
        %v440 = vsel %vm439, %v438, -inf
        %441 = vmax.xlane.f32.xlu0 %v440
        %v442 = vpop.xlane.xlu0 %441
        %v443 = vsub.f32 %v438, %v442
        %v444 = vmul.f32 %v443, 1.442695
        %v445 = vpow.pop %v444
        %v446 = vsel %vm439, %v445, 0.0
        %447 = vadd.xlane.f32.xlu0 %v446
        %v448 = vpop.xlane.xlu0 %447
        %v449 = vlog2.pop %v448
        %v450 = vmul.f32 %v449, 0.6931472
        %v451 = vadd.f32 %v442, %v450
        %v452 = vsel %vm439, %v431, 0.0
        %453 = vadd.xlane.f32.xlu0 %v452
        %v454 = vpop.xlane.xlu0 %453
        %v455 = vsub.f32 %v451, %v454
        %v456 = vld [vmem:[%s390] sm:$0x1]
        %vm457 = vcmask 7168
        %v458 = vsel %vm457, %v455, 0.0
        %459 = vadd.xlane.f32.xlu0 %v458
        %v460 = vpop.xlane.xlu0 %459
        %v461 = vrot.slane %v460, 4
        %v462 = vadd.f32 %v460, %v461
        %v463 = vrot.slane %v462, 2
        %v464 = vadd.f32 %v462, %v463
        %v465 = vrot.slane %v464, 1
        %v466 = vadd.f32 %v464, %v465
        %s467 = vtos %v466
        %v468 = vstv %s467
        %v469 = vadd.f32 %v456, %v468
        %vm470 = vcmask 0
        %471 = vst.msk [vmem:[%s390] sm:$0x1] %vm470, %v469
        %v472 = vld [vmem:[%s393] sm:$0x1]
        %v473 = vrot.slane %v452, 4
        %v474 = vadd.f32 %v452, %v473
        %v475 = vrot.slane %v474, 2
        %v476 = vadd.f32 %v474, %v475
        %v477 = vrot.slane %v476, 1
        %v478 = vadd.f32 %v476, %v477
        %v479 = vadd.f32 %v472, %v478
        %vm480 = vcmask 24576
        %481 = vst.msk [vmem:[%s393] sm:$0x1] %vm480, %v479
        %v482 = vld [vmem:[%s396] sm:$0x1]
        %v483 = vsel %vm430, 1.0, 0.0
        %v484 = vsel %vm439, %v483, 0.0
        %v485 = vrot.slane %v484, 4
        %v486 = vadd.f32 %v484, %v485
        %v487 = vrot.slane %v486, 2
        %v488 = vadd.f32 %v486, %v487
        %v489 = vrot.slane %v488, 1
        %v490 = vadd.f32 %v488, %v489
        %v491 = vadd.f32 %v482, %v490
        %492 = vst.msk [vmem:[%s396] sm:$0x1] %vm480, %v491
        %v494 = vlaneseq
        %v495 = vshrl.u32 %v494, 7
        %v496 = vsub.s32 0, %v495
        %v497 = vrot.slane %v417, %v496
        %v499 = vadd.f32 %v414, %v497
        %v500 = vld [vmem:[%s399] sm:$0x1]
        %v501 = vsel %vm439, %v499, -inf
        %v502 = vrot.slane %v501, 4
        %v503 = vmax.f32 %v501, %v502
        %v504 = vrot.slane %v503, 2
        %v505 = vmax.f32 %v503, %v504
        %v506 = vrot.slane %v505, 1
        %v507 = vmax.f32 %v505, %v506
        %v508 = vmax.f32 %v500, %v507
        %v509 = vld [vmem:[%s402] sm:$0x1]
        %v510 = vsub.f32 %v500, %v508
        %v511 = vmul.f32 %v510, 1.442695
        %v512 = vpow.pop %v511
        %v513 = vmul.f32 %v509, %v512
        %v515 = vlaneseq
        %v516 = vshrl.u32 %v515, 7
        %v517 = vsub.s32 0, %v516
        %v518 = vrot.slane %v508, %v517
        %v520 = vsub.f32 %v499, %v518
        %v521 = vmul.f32 %v520, 1.442695
        %v522 = vpow.pop %v521
        %v523 = vsel %vm439, %v522, 0.0
        %v524 = vrot.slane %v523, 4
        %v525 = vadd.f32 %v523, %v524
        %v526 = vrot.slane %v525, 2
        %v527 = vadd.f32 %v525, %v526
        %v528 = vrot.slane %v527, 1
        %v529 = vadd.f32 %v527, %v528
        %v530 = vadd.f32 %v513, %v529
        %531 = vst.msk [vmem:[%s402] sm:$0x1] %vm480, %v530
        %532 = vst.msk [vmem:[%s399] sm:$0x1] %vm480, %v508
      $region44: #{unified_loss_pallas.1} parent=35 // pred_fallthru
        _
      %p533 = scmp.gt.s32.totalorder %s420, 8
      // Predicated region
      $region45: #{unified_loss_pallas.1} parent=35 // pred_check
        %p534 = pneg %p533
      $region46: #{unified_loss_pallas.1} parent=35 // pred_check_branch
        %536 = sbr.rel (%p534) target = $region48
      $region47: #{unified_loss_pallas.1} parent=35 // pred_region
        %s537 = smul.u32 %s418, 8
        %v538 = vlaneseq
        %v539 = vshrl.u32 %v538, 7
        %v540 = vstv %s537
        %v541 = vadd.s32 %v540, %v539
        %vm542 = vcmp.lt.s32.totalorder %v541, 8
        %v543 = vlaneseq
        %v544 = vand.u32 %v543, 127
        %545 = vset.pattern.permute.xlu0 0
        %546 = vperm.xlu0 %545, %v415
        %v547 = vpop.permute.xlu0 %546
        %vm548 = vcmp.eq.s32.totalorder %v547, %v544
        %v549 = vsel %vm542, 1, 0
        %vm550 = vcmp.eq.s32.totalorder %v549, 1
        %vm551 = vmand %vm548, %vm550
        %v552 = vsel %vm551, %v414, 0.0
        %v554 = vlaneseq
        %v555 = vshrl.u32 %v554, 7
        %v556 = vsub.s32 0, %v555
        %v557 = vrot.slane %v416, %v556
        %v559 = vadd.f32 %v414, %v557
        %vm560 = vcmask 31744
        %v561 = vsel %vm560, %v559, -inf
        %562 = vmax.xlane.f32.xlu0 %v561
        %v563 = vpop.xlane.xlu0 %562
        %v564 = vsub.f32 %v559, %v563
        %v565 = vmul.f32 %v564, 1.442695
        %v566 = vpow.pop %v565
        %v567 = vsel %vm560, %v566, 0.0
        %568 = vadd.xlane.f32.xlu0 %v567
        %v569 = vpop.xlane.xlu0 %568
        %v570 = vlog2.pop %v569
        %v571 = vmul.f32 %v570, 0.6931472
        %v572 = vadd.f32 %v563, %v571
        %v573 = vsel %vm560, %v552, 0.0
        %574 = vadd.xlane.f32.xlu0 %v573
        %v575 = vpop.xlane.xlu0 %574
        %v576 = vsub.f32 %v572, %v575
        %v577 = vsel %vm542, %v576, 0.0
        %v578 = vld [vmem:[%s390] sm:$0x1]
        %vm579 = vcmask 7168
        %v580 = vsel %vm579, %v577, 0.0
        %581 = vadd.xlane.f32.xlu0 %v580
        %v582 = vpop.xlane.xlu0 %581
        %v583 = vrot.slane %v582, 4
        %v584 = vadd.f32 %v582, %v583
        %v585 = vrot.slane %v584, 2
        %v586 = vadd.f32 %v584, %v585
        %v587 = vrot.slane %v586, 1
        %v588 = vadd.f32 %v586, %v587
        %s589 = vtos %v588
        %v590 = vstv %s589
        %v591 = vadd.f32 %v578, %v590
        %vm592 = vcmask 0
        %593 = vst.msk [vmem:[%s390] sm:$0x1] %vm592, %v591
        %v594 = vld [vmem:[%s393] sm:$0x1]
        %v595 = vrot.slane %v573, 4
        %v596 = vadd.f32 %v573, %v595
        %v597 = vrot.slane %v596, 2
        %v598 = vadd.f32 %v596, %v597
        %v599 = vrot.slane %v598, 1
        %v600 = vadd.f32 %v598, %v599
        %v601 = vadd.f32 %v594, %v600
        %vm602 = vcmask 24576
        %603 = vst.msk [vmem:[%s393] sm:$0x1] %vm602, %v601
        %v604 = vld [vmem:[%s396] sm:$0x1]
        %v605 = vsel %vm551, 1.0, 0.0
        %v606 = vsel %vm560, %v605, 0.0
        %v607 = vrot.slane %v606, 4
        %v608 = vadd.f32 %v606, %v607
        %v609 = vrot.slane %v608, 2
        %v610 = vadd.f32 %v608, %v609
        %v611 = vrot.slane %v610, 1
        %v612 = vadd.f32 %v610, %v611
        %v613 = vadd.f32 %v604, %v612
        %614 = vst.msk [vmem:[%s396] sm:$0x1] %vm602, %v613
        %v616 = vlaneseq
        %v617 = vshrl.u32 %v616, 7
        %v618 = vsub.s32 0, %v617
        %v619 = vrot.slane %v417, %v618
        %v621 = vadd.f32 %v414, %v619
        %v622 = vsel %vm550, %v621, -1e+30
        %v623 = vld [vmem:[%s399] sm:$0x1]
        %v624 = vsel %vm560, %v622, -inf
        %v625 = vrot.slane %v624, 4
        %v626 = vmax.f32 %v624, %v625
        %v627 = vrot.slane %v626, 2
        %v628 = vmax.f32 %v626, %v627
        %v629 = vrot.slane %v628, 1
        %v630 = vmax.f32 %v628, %v629
        %v631 = vmax.f32 %v623, %v630
        %v632 = vld [vmem:[%s402] sm:$0x1]
        %v633 = vsub.f32 %v623, %v631
        %v634 = vmul.f32 %v633, 1.442695
        %v635 = vpow.pop %v634
        %v636 = vmul.f32 %v632, %v635
        %v638 = vlaneseq
        %v639 = vshrl.u32 %v638, 7
        %v640 = vsub.s32 0, %v639
        %v641 = vrot.slane %v631, %v640
        %v643 = vsub.f32 %v622, %v641
        %v644 = vmul.f32 %v643, 1.442695
        %v645 = vpow.pop %v644
        %v646 = vsel %vm560, %v645, 0.0
        %v647 = vrot.slane %v646, 4
        %v648 = vadd.f32 %v646, %v647
        %v649 = vrot.slane %v648, 2
        %v650 = vadd.f32 %v648, %v649
        %v651 = vrot.slane %v650, 1
        %v652 = vadd.f32 %v650, %v651
        %v653 = vadd.f32 %v636, %v652
        %654 = vst.msk [vmem:[%s402] sm:$0x1] %vm602, %v653
        %655 = vst.msk [vmem:[%s399] sm:$0x1] %vm602, %v631
      $region48: #{unified_loss_pallas.1} parent=35 // pred_fallthru
        _
      %p656 = scmp.lt.s32.totalorder %s24, 1
      %s657 = scalar_select %p656, %s24, 1
      %s658 = scalar_lea.vmem %s4, %s657
      %p659 = scmp.lt.s32.totalorder %s24, 1
      %s660 = scalar_select %p659, %s24, 1
      %s661 = scalar_lea.vmem %s5, %s660
      %p662 = scmp.lt.s32.totalorder %s24, 1
      %s663 = scalar_select %p662, %s24, 1
      %s664 = scalar_lea.vmem %s6, %s663
      %p665 = scmp.lt.s32.totalorder %s24, 1
      %s666 = scalar_select %p665, %s24, 1
      %s667 = scalar_lea.vmem %s7, %s666
      %p668 = scmp.lt.s32.totalorder %s24, 1
      %s669 = scalar_select %p668, %s24, 1
      %s670 = scalar_lea.vmem %s8, %s669
      // Predicated region
      $region49: #{unified_loss_pallas.1} parent=35 // pred_check
        %p671 = pneg %p156
      $region50: #{unified_loss_pallas.1} parent=35 // pred_check_branch
        %673 = sbr.rel (%p671) target = $region52
      $region51: #{unified_loss_pallas.1} parent=35 // pred_region
        _
      $region52: #{unified_loss_pallas.1} parent=35 // pred_fallthru
        _
      // Predicated region
      $region53: #{unified_loss_pallas.1} parent=35 // pred_check
        %p674 = pneg %p182
      $region54: #{unified_loss_pallas.1} parent=35 // pred_check_branch
        %676 = sbr.rel (%p674) target = $region56
      $region55: #{unified_loss_pallas.1} parent=35 // pred_region
        _
      $region56: #{unified_loss_pallas.1} parent=35 // pred_fallthru
        _
      // Predicated region
      $region57: #{unified_loss_pallas.1} parent=35 // pred_check
        %p677 = pneg %p208
      $region58: #{unified_loss_pallas.1} parent=35 // pred_check_branch
        %679 = sbr.rel (%p677) target = $region60
      $region59: #{unified_loss_pallas.1} parent=35 // pred_region
        _
      $region60: #{unified_loss_pallas.1} parent=35 // pred_fallthru
        _
      // Predicated region
      $region61: #{unified_loss_pallas.1} parent=35 // pred_check
        %p680 = pneg %p234
      $region62: #{unified_loss_pallas.1} parent=35 // pred_check_branch
        %682 = sbr.rel (%p680) target = $region64
      $region63: #{unified_loss_pallas.1} parent=35 // pred_region
        _
      $region64: #{unified_loss_pallas.1} parent=35 // pred_fallthru
        _
      // Predicated region
      $region65: #{unified_loss_pallas.1} parent=35 // pred_check
        %p683 = pneg %p260
      $region66: #{unified_loss_pallas.1} parent=35 // pred_check_branch
        %685 = sbr.rel (%p683) target = $region68
      $region67: #{unified_loss_pallas.1} parent=35 // pred_region
        _
      $region68: #{unified_loss_pallas.1} parent=35 // pred_fallthru
        _
    $region36: #{unified_loss_pallas.1} parent=5 // pred_fallthru
      _
    %p686 = scmp.le.s32.totalorder 2, %s15
    // Predicated region
    $region69: #{unified_loss_pallas.1} parent=5 // pred_check
      %p687 = pneg %p686
    $region70: #{unified_loss_pallas.1} parent=5 // pred_check_branch
      %689 = sbr.rel (%p687) target = $region72
    $region71: #{unified_loss_pallas.1} parent=5 // pred_region
      %s690 = ssub.s32 %s15, 2
      // Predicated region
      $region73: #{unified_loss_pallas.1} parent=71 // pred_check
        %p691 = pneg %p162
      $region74: #{unified_loss_pallas.1} parent=71 // pred_check_branch
        %693 = sbr.rel (%p691) target = $region76
      $region75: #{unified_loss_pallas.1} parent=71 // pred_region
        %p694 = scmp.lt.s32.totalorder %s26, 1
        %s695 = scalar_select %p694, %s26, 1
        %s696 = scalar_lea.vmem %s4, %s695
      $region76: #{unified_loss_pallas.1} parent=71 // pred_fallthru
        _
      // Predicated region
      $region77: #{unified_loss_pallas.1} parent=71 // pred_check
        %p697 = pneg %p188
      $region78: #{unified_loss_pallas.1} parent=71 // pred_check_branch
        %699 = sbr.rel (%p697) target = $region80
      $region79: #{unified_loss_pallas.1} parent=71 // pred_region
        %p700 = scmp.lt.s32.totalorder %s26, 1
        %s701 = scalar_select %p700, %s26, 1
        %s702 = scalar_lea.vmem %s5, %s701
      $region80: #{unified_loss_pallas.1} parent=71 // pred_fallthru
        _
      // Predicated region
      $region81: #{unified_loss_pallas.1} parent=71 // pred_check
        %p703 = pneg %p214
      $region82: #{unified_loss_pallas.1} parent=71 // pred_check_branch
        %705 = sbr.rel (%p703) target = $region84
      $region83: #{unified_loss_pallas.1} parent=71 // pred_region
        %p706 = scmp.lt.s32.totalorder %s26, 1
        %s707 = scalar_select %p706, %s26, 1
        %s708 = scalar_lea.vmem %s6, %s707
      $region84: #{unified_loss_pallas.1} parent=71 // pred_fallthru
        _
      // Predicated region
      $region85: #{unified_loss_pallas.1} parent=71 // pred_check
        %p709 = pneg %p240
      $region86: #{unified_loss_pallas.1} parent=71 // pred_check_branch
        %711 = sbr.rel (%p709) target = $region88
      $region87: #{unified_loss_pallas.1} parent=71 // pred_region
        %p712 = scmp.lt.s32.totalorder %s26, 1
        %s713 = scalar_select %p712, %s26, 1
        %s714 = scalar_lea.vmem %s7, %s713
      $region88: #{unified_loss_pallas.1} parent=71 // pred_fallthru
        _
      // Predicated region
      $region89: #{unified_loss_pallas.1} parent=71 // pred_check
        %p715 = pneg %p266
      $region90: #{unified_loss_pallas.1} parent=71 // pred_check_branch
        %717 = sbr.rel (%p715) target = $region92
      $region91: #{unified_loss_pallas.1} parent=71 // pred_region
        %p718 = scmp.lt.s32.totalorder %s26, 1
        %s719 = scalar_select %p718, %s26, 1
        %s720 = scalar_lea.vmem %s8, %s719
      $region92: #{unified_loss_pallas.1} parent=71 // pred_fallthru
        _
    $region72: #{unified_loss_pallas.1} parent=5 // pred_fallthru
      _
  $region6: #{unified_loss_pallas.1} parent=0 // loop_footer
    %s19 = sadd.s32 1, %s15
  $region7: #{unified_loss_pallas.1} parent=0 // loop_footer_branch
    %14 = sbr.rel target = $region3
  $region8: #{unified_loss_pallas.1} parent=0 // loop_exit
    _

</llo_original>
